<compile_context>
chip_gen: v5e
topology: v5e:2x2
jax: 0.10.0
libtpu: 0.0.40
codegen_flags: <defaults>
</compile_context>

<pallas_src>
import functools

import jax
import jax.numpy as jnp
from jax.experimental import pallas as pl
from jax.experimental.pallas import tpu as pltpu

# Real layer dims (PyTorch Net): 16 -> 120 -> 84 -> 24.
F_IN, H1, H2, F_OUT = 16, 120, 84, 24
# Lane-padded hidden widths (lane-dense vregs, clean MXU K/N).
H1P, H2P = 128, 128


def _round_up(n, m):
    return ((n + m - 1) // m) * m


def _mlp_kernel(x_ref, w1_ref, b1_ref, w2_ref, b2_ref, w3_ref, b3_ref, o_ref):
    # fc1 + ReLU
    h1 = jnp.dot(x_ref[...], w1_ref[...], preferred_element_type=jnp.float32)
    h1 = jnp.maximum(h1 + b1_ref[...], 0.0)
    # fc2 + ReLU
    h2 = jnp.dot(h1, w2_ref[...], preferred_element_type=jnp.float32)
    h2 = jnp.maximum(h2 + b2_ref[...], 0.0)
    # fc3 (no activation)
    h3 = jnp.dot(h2, w3_ref[...], preferred_element_type=jnp.float32)
    o_ref[...] = (h3 + b3_ref[...]).astype(o_ref.dtype)


def pad_params(w1, b1, w2, b2, w3, b3):
    """One-time lane-padding of weights/biases to 128-wide hidden dims.

    Weights are stored (in, out).  Padded hidden columns stay exactly zero
    through bias-add + ReLU and the corresponding downstream rows are zero,
    so results match the unpadded network bit-for-bit in f32.
    Accepts 1-D (out,) or 2-D (1, out) biases.
    """
    dt = w1.dtype
    b1 = jnp.asarray(b1).reshape(1, -1)
    b2 = jnp.asarray(b2).reshape(1, -1)
    b3 = jnp.asarray(b3).reshape(1, -1)
    w1p = jnp.zeros((F_IN, H1P), dt).at[:, :H1].set(w1)
    b1p = jnp.zeros((1, H1P), dt).at[:, :H1].set(b1)
    w2p = jnp.zeros((H1P, H2P), dt).at[:H1, :H2].set(w2)
    b2p = jnp.zeros((1, H2P), dt).at[:, :H2].set(b2)
    w3p = jnp.zeros((H2P, F_OUT), dt).at[:H2, :].set(w3)
    b3p = b3
    return w1p, b1p, w2p, b2p, w3p, b3p


@functools.partial(jax.jit, static_argnames=("block_batch",))
def mlp_forward(x, padded_params, *, block_batch=4096):
    """Fused 3-layer MLP.  x: (B, 16); padded_params from pad_params()."""
    w1p, b1p, w2p, b2p, w3p, b3p = padded_params
    B = x.shape[0]
    dt = x.dtype

    # Batch tile: 8-sublane aligned; for large B keep it 512-aligned for the
    # MXU and keep >= 2 grid steps so megacore / v7x's 2 TCs can both work.
    if B <= 1024:
        tb = _round_up(max(B, 1), 8)
    else:
        tb = min(block_batch, _round_up(pl.cdiv(B, 2), 512))
    grid = (pl.cdiv(B, tb),)  # ragged last block: Pallas masks OOB writes.

    resident = lambda shape: pl.BlockSpec(shape, lambda i: (0, 0))

    param_bytes = 4 * (w1p.size + b1p.size + w2p.size + b2p.size + w3p.size + b3p.size)
    cost = pl.CostEstimate(
        flops=2 * B * (F_IN * H1 + H1 * H2 + H2 * F_OUT),
        transcendentals=0,
        bytes_accessed=4 * (B * F_IN + B * F_OUT) + param_bytes,
    )

    return pl.pallas_call(
        _mlp_kernel,
        out_shape=jax.ShapeDtypeStruct((B, F_OUT), dt),
        grid=grid,
        in_specs=[
            pl.BlockSpec((tb, F_IN), lambda i: (i, 0)),    # x: tiled over batch
            resident(w1p.shape), resident(b1p.shape),       # params: VMEM-resident
            resident(w2p.shape), resident(b2p.shape),
            resident(w3p.shape), resident(b3p.shape),
        ],
        out_specs=pl.BlockSpec((tb, F_OUT), lambda i: (i, 0)),
        compiler_params=pltpu.CompilerParams(
            # On v7x an explicit CORE_PARALLEL / core_map split is a further
            # option; PARALLEL keeps this portable across v5e/v6e/v7x.
            dimension_semantics=(pltpu.PARALLEL,),
            vmem_limit_bytes=32 * 1024 * 1024,
        ),
        cost_estimate=cost,
    )(x, w1p, b1p, w2p, b2p, w3p, b3p)


def init_params(key):
    """Deterministic init mirroring nn.Linear (weights stored as (in, out))."""
    dims = [(F_IN, H1), (H1, H2), (H2, F_OUT)]
    params = []
    for fan_in, fan_out in dims:
        kw, kb, key = jax.random.split(key, 3)
        bound = 1.0 / jnp.sqrt(fan_in)
        w = jax.random.uniform(kw, (fan_in, fan_out), jnp.float32, -bound, bound)
        b = jax.random.uniform(kb, (1, fan_out), jnp.float32, -bound, bound)
        params += [w, b]
    return params


def _reference(x, w1, b1, w2, b2, w3, b3):
    h = jnp.maximum(x @ w1 + b1, 0.0)
    h = jnp.maximum(h @ w2 + b2, 0.0)
    return h @ w3 + b3


if __name__ == "__main__":
    key = jax.random.PRNGKey(0)
    kx1, kx2, kx3, kp = jax.random.split(key, 4)
    w1, b1, w2, b2, w3, b3 = init_params(kp)
    padded = pad_params(w1, b1, w2, b2, w3, b3)  # one-time padding at init

    # Small batch (single-tile path).
    x_small = jax.random.normal(kx1, (8, F_IN), dtype=jnp.float32)
    out_small = mlp_forward(x_small, padded)
    jax.block_until_ready(out_small)
    assert out_small.shape == (8, F_OUT)
    assert jnp.allclose(out_small, _reference(x_small, w1, b1, w2, b2, w3, b3),
                        atol=1e-5, rtol=1e-5)

    # Non-multiple-of-8 batch (single ragged block, masked writeback).
    x_mid = jax.random.normal(kx2, (1000, F_IN), dtype=jnp.float32)
    out_mid = mlp_forward(x_mid, padded)
    jax.block_until_ready(out_mid)
    assert out_mid.shape == (1000, F_OUT)
    assert jnp.allclose(out_mid, _reference(x_mid, w1, b1, w2, b2, w3, b3),
                        atol=1e-5, rtol=1e-5)

    # Larger batch: multi-step grid (>= 2 tiles) with a ragged last block.
    x_big = jax.random.normal(kx3, (2000, F_IN), dtype=jnp.float32)
    out_big = mlp_forward(x_big, padded)
    jax.block_until_ready(out_big)
    assert out_big.shape == (2000, F_OUT)
    assert jnp.allclose(out_big, _reference(x_big, w1, b1, w2, b2, w3, b3),
                        atol=1e-5, rtol=1e-5)

    print("KERNEL_OK")
</pallas_src>

<mosaic_0001>
module attributes {stable_mosaic.version = 11 : i64} {
  func.func @_mlp_kernel(%arg0: i32, %arg1: memref<8x16xf32, #tpu.memory_space<vmem>>, %arg2: memref<16x128xf32, #tpu.memory_space<vmem>>, %arg3: memref<1x128xf32, #tpu.memory_space<vmem>>, %arg4: memref<128x128xf32, #tpu.memory_space<vmem>>, %arg5: memref<1x128xf32, #tpu.memory_space<vmem>>, %arg6: memref<128x24xf32, #tpu.memory_space<vmem>>, %arg7: memref<1x24xf32, #tpu.memory_space<vmem>>, %arg8: memref<8x24xf32, #tpu.memory_space<vmem>>) attributes {dimension_semantics = [#tpu.dimension_semantics<parallel>], iteration_bounds = array<i64: 1>, scalar_prefetch = 0 : i64, scratch_operands = 0 : i64, tpu.core_type = #tpu.core_type<tc>, window_params = [{transform_indices = @transform_0, window_bounds = array<i64: 8, 16>}, {pipeline_mode = #tpu.pipeline_mode<synchronous>, transform_indices = @transform_1, window_bounds = array<i64: 16, 128>}, {pipeline_mode = #tpu.pipeline_mode<synchronous>, transform_indices = @transform_2, window_bounds = array<i64: 1, 128>}, {pipeline_mode = #tpu.pipeline_mode<synchronous>, transform_indices = @transform_3, window_bounds = array<i64: 128, 128>}, {pipeline_mode = #tpu.pipeline_mode<synchronous>, transform_indices = @transform_4, window_bounds = array<i64: 1, 128>}, {pipeline_mode = #tpu.pipeline_mode<synchronous>, transform_indices = @transform_5, window_bounds = array<i64: 128, 24>}, {pipeline_mode = #tpu.pipeline_mode<synchronous>, transform_indices = @transform_6, window_bounds = array<i64: 1, 24>}, {transform_indices = @transform_7, window_bounds = array<i64: 8, 24>}]} {
    %c0 = arith.constant 0 : index
    %c0_0 = arith.constant 0 : index
    %0 = vector.load %arg1[%c0, %c0_0] : memref<8x16xf32, #tpu.memory_space<vmem>>, vector<8x16xf32>
    %c0_1 = arith.constant 0 : index
    %c0_2 = arith.constant 0 : index
    %1 = vector.load %arg2[%c0_1, %c0_2] : memref<16x128xf32, #tpu.memory_space<vmem>>, vector<16x128xf32>
    %cst = arith.constant dense<0.000000e+00> : vector<8x128xf32>
    %2 = tpu.matmul %0, %1, %cst {dimension_numbers = #tpu.dot_dimension_numbers<[1], [0], [0], [1], [0, 0, 1, 1], [], []>} : vector<8x16xf32>, vector<16x128xf32>, vector<8x128xf32> -> vector<8x128xf32>
    %c0_3 = arith.constant 0 : index
    %c0_4 = arith.constant 0 : index
    %3 = vector.load %arg3[%c0_3, %c0_4] : memref<1x128xf32, #tpu.memory_space<vmem>>, vector<1x128xf32>
    %4 = vector.broadcast %3 : vector<1x128xf32> to vector<8x128xf32>
    %5 = arith.addf %2, %4 : vector<8x128xf32>
    %cst_5 = arith.constant 0.000000e+00 : f32
    %6 = vector.broadcast %cst_5 : f32 to vector<8x128xf32>
    %7 = arith.maximumf %5, %6 : vector<8x128xf32>
    %c0_6 = arith.constant 0 : index
    %c0_7 = arith.constant 0 : index
    %8 = vector.load %arg4[%c0_6, %c0_7] : memref<128x128xf32, #tpu.memory_space<vmem>>, vector<128x128xf32>
    %cst_8 = arith.constant dense<0.000000e+00> : vector<8x128xf32>
    %9 = tpu.matmul %7, %8, %cst_8 {dimension_numbers = #tpu.dot_dimension_numbers<[1], [0], [0], [1], [0, 0, 1, 1], [], []>} : vector<8x128xf32>, vector<128x128xf32>, vector<8x128xf32> -> vector<8x128xf32>
    %c0_9 = arith.constant 0 : index
    %c0_10 = arith.constant 0 : index
    %10 = vector.load %arg5[%c0_9, %c0_10] : memref<1x128xf32, #tpu.memory_space<vmem>>, vector<1x128xf32>
    %11 = vector.broadcast %10 : vector<1x128xf32> to vector<8x128xf32>
    %12 = arith.addf %9, %11 : vector<8x128xf32>
    %cst_11 = arith.constant 0.000000e+00 : f32
    %13 = vector.broadcast %cst_11 : f32 to vector<8x128xf32>
    %14 = arith.maximumf %12, %13 : vector<8x128xf32>
    %c0_12 = arith.constant 0 : index
    %c0_13 = arith.constant 0 : index
    %15 = vector.load %arg6[%c0_12, %c0_13] : memref<128x24xf32, #tpu.memory_space<vmem>>, vector<128x24xf32>
    %cst_14 = arith.constant dense<0.000000e+00> : vector<8x24xf32>
    %16 = tpu.matmul %14, %15, %cst_14 {dimension_numbers = #tpu.dot_dimension_numbers<[1], [0], [0], [1], [0, 0, 1, 1], [], []>} : vector<8x128xf32>, vector<128x24xf32>, vector<8x24xf32> -> vector<8x24xf32>
    %c0_15 = arith.constant 0 : index
    %c0_16 = arith.constant 0 : index
    %17 = vector.load %arg7[%c0_15, %c0_16] : memref<1x24xf32, #tpu.memory_space<vmem>>, vector<1x24xf32>
    %18 = vector.broadcast %17 : vector<1x24xf32> to vector<8x24xf32>
    %19 = arith.addf %16, %18 : vector<8x24xf32>
    %c0_17 = arith.constant 0 : index
    %c0_18 = arith.constant 0 : index
    %20 = vector.load %arg8[%c0_17, %c0_18] : memref<8x24xf32, #tpu.memory_space<vmem>>, vector<8x24xf32>
    tpu.vector_store %arg8[%c0_17, %c0_18], %19 {strides = array<i32>} : memref<8x24xf32, #tpu.memory_space<vmem>>, vector<8x24xf32>,
    return
  }
  func.func @transform_0(%arg0: i32) -> (i32, i32) {
    %c0_i32 = arith.constant 0 : i32
    %c0_i32_0 = arith.constant 0 : i32
    return %arg0, %c0_i32 : i32, i32
  }
  func.func @transform_1(%arg0: i32) -> (i32, i32) {
    %c0_i32 = arith.constant 0 : i32
    %c0_i32_0 = arith.constant 0 : i32
    %c0_i32_1 = arith.constant 0 : i32
    return %c0_i32, %c0_i32_0 : i32, i32
  }
  func.func @transform_2(%arg0: i32) -> (i32, i32) {
    %c0_i32 = arith.constant 0 : i32
    %c0_i32_0 = arith.constant 0 : i32
    %c0_i32_1 = arith.constant 0 : i32
    return %c0_i32, %c0_i32_0 : i32, i32
  }
  func.func @transform_3(%arg0: i32) -> (i32, i32) {
    %c0_i32 = arith.constant 0 : i32
    %c0_i32_0 = arith.constant 0 : i32
    %c0_i32_1 = arith.constant 0 : i32
    return %c0_i32, %c0_i32_0 : i32, i32
  }
  func.func @transform_4(%arg0: i32) -> (i32, i32) {
    %c0_i32 = arith.constant 0 : i32
    %c0_i32_0 = arith.constant 0 : i32
    %c0_i32_1 = arith.constant 0 : i32
    return %c0_i32, %c0_i32_0 : i32, i32
  }
  func.func @transform_5(%arg0: i32) -> (i32, i32) {
    %c0_i32 = arith.constant 0 : i32
    %c0_i32_0 = arith.constant 0 : i32
    %c0_i32_1 = arith.constant 0 : i32
    return %c0_i32, %c0_i32_0 : i32, i32
  }
  func.func @transform_6(%arg0: i32) -> (i32, i32) {
    %c0_i32 = arith.constant 0 : i32
    %c0_i32_0 = arith.constant 0 : i32
    %c0_i32_1 = arith.constant 0 : i32
    return %c0_i32, %c0_i32_0 : i32, i32
  }
  func.func @transform_7(%arg0: i32) -> (i32, i32) {
    %c0_i32 = arith.constant 0 : i32
    %c0_i32_0 = arith.constant 0 : i32
    return %arg0, %c0_i32 : i32, i32
  }
}

</mosaic_0001>

<llo_original>
// kernel: mlp_forward.1
$region0: #{mlp_forward.1}
  #allocation0 [shape = 'u32[]', space=smem, size = 0x4, offset = 0x4, fixed_abs, tag = 'smem constant byte address 0x4 - core index']
  #allocation1 [shape = 'u32[72,128]{1,0:T(1,128)}', space=vmem, size = 0x9000, scoped, tag = 'internal scratch']
  %s0 = inlined_call_operand.vmem [shape: f32[8,16], index: 0, kind: input, shape index: {}]
  %s1 = inlined_call_operand.vmem [shape: f32[16,128], index: 1, kind: input, shape index: {}]
  %s2 = inlined_call_operand.vmem [shape: f32[1,128], index: 2, kind: input, shape index: {}]
  %s3 = inlined_call_operand.vmem [shape: f32[128,128], index: 3, kind: input, shape index: {}]
  %s4 = inlined_call_operand.vmem [shape: f32[1,128], index: 4, kind: input, shape index: {}]
  %s5 = inlined_call_operand.vmem [shape: f32[128,24], index: 5, kind: input, shape index: {}]
  %s6 = inlined_call_operand.vmem [shape: f32[1,24], index: 6, kind: input, shape index: {}]
  %s7 = inlined_call_operand.hbm [shape: f32[8,24], index: 7, kind: output, shape index: {}]
  %s8 = sld [smem:[#allocation0]]
  $region38: #{mlp_forward.1} parent=0
    _
  %s10 = ssub.s32 1, %s8
  %s11 = scalar_select 0, %s10, %s8
  $region1: #{mlp_forward.1} parent=0
    #allocation2 [shape = 'u8[4096]{0}', space=vmem, size = 0x1000, scoped, tag = 'output window, operand 0, single buffered']
    #allocation3 [shape = 's32[1]{0}', space=sflag, size = 0x4, scoped, tag = 'scoped memory for mlp_forward.1']
    %12 = vsyncpa [#allocation3], 0
    // Predicated region
    $region2: #{mlp_forward.1} parent=1 // pred_check
      _
    $region3: #{mlp_forward.1} parent=1 // pred_check_branch
      %14 = sbr.rel (0) target = $region5
    $region4: #{mlp_forward.1} parent=1 // pred_region
      _
    $region5: #{mlp_forward.1} parent=1 // pred_fallthru
      _
    // Predicated region
    $region6: #{mlp_forward.1} parent=1 // pred_check
      _
    $region7: #{mlp_forward.1} parent=1 // pred_check_branch
      %16 = sbr.rel (0) target = $region9
    $region8: #{mlp_forward.1} parent=1 // pred_region
      _
    $region9: #{mlp_forward.1} parent=1 // pred_fallthru
      _
    // Predicated region
    $region10: #{mlp_forward.1} parent=1 // pred_check
      _
    $region11: #{mlp_forward.1} parent=1 // pred_check_branch
      %18 = sbr.rel (0) target = $region13
    $region12: #{mlp_forward.1} parent=1 // pred_region
      _
    $region13: #{mlp_forward.1} parent=1 // pred_fallthru
      _
    // Predicated region
    $region14: #{mlp_forward.1} parent=1 // pred_check
      _
    $region15: #{mlp_forward.1} parent=1 // pred_check_branch
      %20 = sbr.rel (0) target = $region17
    $region16: #{mlp_forward.1} parent=1 // pred_region
      _
    $region17: #{mlp_forward.1} parent=1 // pred_fallthru
      _
    // Predicated region
    $region18: #{mlp_forward.1} parent=1 // pred_check
      _
    $region19: #{mlp_forward.1} parent=1 // pred_check_branch
      %22 = sbr.rel (0) target = $region21
    $region20: #{mlp_forward.1} parent=1 // pred_region
      _
    $region21: #{mlp_forward.1} parent=1 // pred_fallthru
      _
    // Predicated region
    $region22: #{mlp_forward.1} parent=1 // pred_check
      _
    $region23: #{mlp_forward.1} parent=1 // pred_check_branch
      %24 = sbr.rel (0) target = $region25
    $region24: #{mlp_forward.1} parent=1 // pred_region
      _
    $region25: #{mlp_forward.1} parent=1 // pred_fallthru
      _
    // Predicated region
    $region26: #{mlp_forward.1} parent=1 // pred_check
      _
    $region27: #{mlp_forward.1} parent=1 // pred_check_branch
      %26 = sbr.rel (0) target = $region29
    $region28: #{mlp_forward.1} parent=1 // pred_region
      _
    $region29: #{mlp_forward.1} parent=1 // pred_fallthru
      _
    %v27 = vld [vmem:[%s0] sm:$0xff]
    %v28 = vld [vmem:[%s1] sm:$0xff]
    %v29 = vld [vmem:[%s1 + $0x8] sm:$0xff]
    %v30 = vld [vmem:[%s2] sm:$0x1]
    %v32 = vperm.slane %v30, 0
    %vm34 = vcmask 130048
    %v36 = vsel %vm34, %v27, 0
    %38 = vmatpush.msra.mxu0 0.0
    %39 = vmatpush.msra.mxu0 0.0
    %40 = vmatpush.msra.mxu0 0.0
    %41 = vmatpush.msra.mxu0 0.0
    %42 = vmatpush.msra.mxu0 0.0
    %43 = vmatpush.msra.mxu0 0.0
    %44 = vmatpush.msra.mxu0 0.0
    %45 = vmatpush.msra.mxu0 0.0
    %46 = vmatpush.msra.mxu0 0.0
    %47 = vmatpush.msra.mxu0 0.0
    %48 = vmatpush.msra.mxu0 0.0
    %49 = vmatpush.msra.mxu0 0.0
    %50 = vmatpush.msra.mxu0 0.0
    %51 = vmatpush.msra.mxu0 0.0
    %52 = vmatpush.msra.mxu0 %v29
    %53 = vmatpush.msra.mxu0 %v28
    %54 = vmatmul.f32.gmra.mxu0 %v36
    %v55 = vpop.f32.mrf.mxu0
    %v56 = vadd.f32 %v32, %v55
    %57 = vdwg.mxu0
    %v58 = vmax.f32 %v56, 0.0
    %v59 = vld [vmem:[%s3] sm:$0xff]
    %v60 = vld [vmem:[%s3 + $0x8] sm:$0xff]
    %v61 = vld [vmem:[%s3 + $0x10] sm:$0xff]
    %v62 = vld [vmem:[%s3 + $0x18] sm:$0xff]
    %v63 = vld [vmem:[%s3 + $0x20] sm:$0xff]
    %v64 = vld [vmem:[%s3 + $0x28] sm:$0xff]
    %v65 = vld [vmem:[%s3 + $0x30] sm:$0xff]
    %v66 = vld [vmem:[%s3 + $0x38] sm:$0xff]
    %v67 = vld [vmem:[%s3 + $0x40] sm:$0xff]
    %v68 = vld [vmem:[%s3 + $0x48] sm:$0xff]
    %v69 = vld [vmem:[%s3 + $0x50] sm:$0xff]
    %v70 = vld [vmem:[%s3 + $0x58] sm:$0xff]
    %v71 = vld [vmem:[%s3 + $0x60] sm:$0xff]
    %v72 = vld [vmem:[%s3 + $0x68] sm:$0xff]
    %v73 = vld [vmem:[%s3 + $0x70] sm:$0xff]
    %v74 = vld [vmem:[%s3 + $0x78] sm:$0xff]
    %v75 = vld [vmem:[%s4] sm:$0x1]
    %v77 = vperm.slane %v75, 0
    %79 = vmatpush.msra.mxu0 %v74
    %80 = vmatpush.msra.mxu0 %v73
    %81 = vmatpush.msra.mxu0 %v72
    %82 = vmatpush.msra.mxu0 %v71
    %83 = vmatpush.msra.mxu0 %v70
    %84 = vmatpush.msra.mxu0 %v69
    %85 = vmatpush.msra.mxu0 %v68
    %86 = vmatpush.msra.mxu0 %v67
    %87 = vmatpush.msra.mxu0 %v66
    %88 = vmatpush.msra.mxu0 %v65
    %89 = vmatpush.msra.mxu0 %v64
    %90 = vmatpush.msra.mxu0 %v63
    %91 = vmatpush.msra.mxu0 %v62
    %92 = vmatpush.msra.mxu0 %v61
    %93 = vmatpush.msra.mxu0 %v60
    %94 = vmatpush.msra.mxu0 %v59
    %95 = vmatmul.f32.gmra.mxu0 %v58
    %v96 = vpop.f32.mrf.mxu0
    %v97 = vadd.f32 %v77, %v96
    %98 = vdwg.mxu0
    %v99 = vmax.f32 %v97, 0.0
    %v100 = vld [vmem:[%s5] sm:$0xff]
    %v101 = vld [vmem:[%s5 + $0x8] sm:$0xff]
    %v102 = vld [vmem:[%s5 + $0x10] sm:$0xff]
    %v103 = vld [vmem:[%s5 + $0x18] sm:$0xff]
    %v104 = vld [vmem:[%s5 + $0x20] sm:$0xff]
    %v105 = vld [vmem:[%s5 + $0x28] sm:$0xff]
    %v106 = vld [vmem:[%s5 + $0x30] sm:$0xff]
    %v107 = vld [vmem:[%s5 + $0x38] sm:$0xff]
    %v108 = vld [vmem:[%s5 + $0x40] sm:$0xff]
    %v109 = vld [vmem:[%s5 + $0x48] sm:$0xff]
    %v110 = vld [vmem:[%s5 + $0x50] sm:$0xff]
    %v111 = vld [vmem:[%s5 + $0x58] sm:$0xff]
    %v112 = vld [vmem:[%s5 + $0x60] sm:$0xff]
    %v113 = vld [vmem:[%s5 + $0x68] sm:$0xff]
    %v114 = vld [vmem:[%s5 + $0x70] sm:$0xff]
    %v115 = vld [vmem:[%s5 + $0x78] sm:$0xff]
    %v116 = vld [vmem:[%s6] sm:$0x1]
    %v118 = vperm.slane %v116, 0
    %120 = vmatpush.msra.mxu0 %v115
    %121 = vmatpush.msra.mxu0 %v114
    %122 = vmatpush.msra.mxu0 %v113
    %123 = vmatpush.msra.mxu0 %v112
    %124 = vmatpush.msra.mxu0 %v111
    %125 = vmatpush.msra.mxu0 %v110
    %126 = vmatpush.msra.mxu0 %v109
    %127 = vmatpush.msra.mxu0 %v108
    %128 = vmatpush.msra.mxu0 %v107
    %129 = vmatpush.msra.mxu0 %v106
    %130 = vmatpush.msra.mxu0 %v105
    %131 = vmatpush.msra.mxu0 %v104
    %132 = vmatpush.msra.mxu0 %v103
    %133 = vmatpush.msra.mxu0 %v102
    %134 = vmatpush.msra.mxu0 %v101
    %135 = vmatpush.msra.mxu0 %v100
    %136 = vmatmul.f32.gmra.mxu0 %v99
    %v137 = vpop.f32.mrf.mxu0
    %v138 = vadd.f32 %v118, %v137
    %139 = vdwg.mxu0
    %vm140 = vcmask 195584
    %141 = vst.msk [vmem:[#allocation2] sm:$0xff] %vm140, %v138
    // Predicated region
    $region30: #{mlp_forward.1} parent=1 // pred_check
      _
    $region31: #{mlp_forward.1} parent=1 // pred_check_branch
      %143 = sbr.rel (0) target = $region33
    $region32: #{mlp_forward.1} parent=1 // pred_region
      %145 = vsyncadd [#allocation3], 0
      %s147 = sshll.u32 [#allocation2], 4
      %s148 = int_to_ptr.vmem [resolvable:$true] %s147
      %s149 = sshll.u32 %s7, 4
      %s150 = int_to_ptr.hbm [resolvable:$true] %s149
      %152 = dma.vmem_to_hbm [thread:$0]  %s148, 128, %s150, [#allocation3]
    $region33: #{mlp_forward.1} parent=1 // pred_fallthru
      _
    // Predicated region
    $region34: #{mlp_forward.1} parent=1 // pred_check
      _
    $region35: #{mlp_forward.1} parent=1 // pred_check_branch
      %154 = sbr.rel (0) target = $region37
    $region36: #{mlp_forward.1} parent=1 // pred_region
      %156 = dma.done [#allocation3], 128
    $region37: #{mlp_forward.1} parent=1 // pred_fallthru
      _
    %157 = vsyncpa [#allocation3], 1

</llo_original>
